<compile_context>
chip_gen: v5e
topology: v5e:2x2
jax: 0.10.0
libtpu: 0.0.40
codegen_flags: <defaults>
</compile_context>

<pallas_src>
import jax
import jax.numpy as jnp
from jax.experimental import pallas as pl
from jax.experimental.pallas import tpu as pltpu


# ------------------------------ Pallas kernel ------------------------------

def rotary_kernel(x_ref, cos_ref, sin_ref, rot_ref, o_ref):
    """One (batch, T-block):  y = x * cos + (x @ R) * sin   (f32 on-chip).

    R is a block-diagonal (per-head) signed pair-swap matrix such that
        (x @ R)[:, 2i]   = -x[:, 2i+1]
        (x @ R)[:, 2i+1] = +x[:, 2i]
    which is exactly the GPT-NeoX interleaved rotation.
    """
    x = x_ref[...].astype(jnp.float32)                       # (t_blk, H*D)
    xs = jnp.dot(x, rot_ref[...], preferred_element_type=jnp.float32)
    y = x * cos_ref[...] + xs * sin_ref[...]
    o_ref[...] = y.astype(o_ref.dtype)


# ------------------------------ host wrappers ------------------------------

def make_rotary_tables(T, H, D, base=10000.0):
    """Build cos/sin tables (T, H*D) and the pair-swap matrix (H*D, H*D).

    Computed once and reusable across calls (e.g. for both q and k), per the
    performance feedback.
    """
    inv_freq = 1.0 / (base ** (jnp.arange(0, D, 2, dtype=jnp.float32) / D))
    t = jnp.arange(T, dtype=jnp.float32)
    freqs = jnp.outer(t, inv_freq)                            # (T, D//2)
    # Repeat each pair value to both interleaved positions: [c0,c0,c1,c1,...]
    cos = jnp.repeat(jnp.cos(freqs), 2, axis=-1)              # (T, D)
    sin = jnp.repeat(jnp.sin(freqs), 2, axis=-1)              # (T, D)
    # Tile across heads to match the flattened (h, d) channel layout.
    cos_full = jnp.tile(cos, (1, H))                          # (T, H*D)
    sin_full = jnp.tile(sin, (1, H))                          # (T, H*D)
    # Per-head signed pair-swap matrix, block-diagonal over heads.
    d = jnp.arange(D)
    r = ((d[None, :] == d[:, None] + 1) & (d[:, None] % 2 == 0)).astype(jnp.float32) \
      - ((d[None, :] == d[:, None] - 1) & (d[:, None] % 2 == 1)).astype(jnp.float32)
    rot = jnp.kron(jnp.eye(H, dtype=jnp.float32), r)          # (H*D, H*D)
    return cos_full, sin_full, rot


def apply_rotary(x, cos_full, sin_full, rot, *, t_block=None):
    """x: (B, T, H, D) -> (B, T, H, D) with interleaved rotary applied."""
    B, T, H, D = x.shape
    C = H * D
    x2 = x.reshape(B, T, C)                                   # free, row-major view

    if t_block is None:
        t_block = T if T <= 256 else 256                      # rows per grid step
    grid = (B, pl.cdiv(T, t_block))

    x_spec = pl.BlockSpec((None, t_block, C), lambda b, i: (b, i, 0))
    tab_spec = pl.BlockSpec((t_block, C), lambda b, i: (i, 0))
    rot_spec = pl.BlockSpec((C, C), lambda b, i: (0, 0))      # resident across steps

    y2 = pl.pallas_call(
        rotary_kernel,
        out_shape=jax.ShapeDtypeStruct((B, T, C), x.dtype),
        grid=grid,
        in_specs=[x_spec, tab_spec, tab_spec, rot_spec],
        out_specs=x_spec,
        compiler_params=pltpu.CompilerParams(
            dimension_semantics=("parallel", "parallel")),
    )(x2, cos_full, sin_full, rot)
    return y2.reshape(B, T, H, D)


# --------------------------- pure-JAX reference ---------------------------

def rotary_reference(x, base=10000.0):
    B, T, H, D = x.shape
    inv_freq = 1.0 / (base ** (jnp.arange(0, D, 2, dtype=jnp.float32) / D))
    t = jnp.arange(T, dtype=jnp.float32)
    freqs = jnp.outer(t, inv_freq)
    cos = jnp.cos(freqs)[None, :, None, :]
    sin = jnp.sin(freqs)[None, :, None, :]
    x1 = x[..., 0::2]
    x2 = x[..., 1::2]
    y1 = x1 * cos - x2 * sin
    y2 = x1 * sin + x2 * cos
    return jnp.stack((y1, y2), axis=-1).reshape(B, T, H, D)


# ----------------------------------- main -----------------------------------

if __name__ == "__main__":
    # Small shapes consistent with the module usage: (B, T, H, D)
    B, T, H, D = 2, 8, 2, 16

    key = jax.random.PRNGKey(0)
    kq, kk = jax.random.split(key)
    q = jax.random.normal(kq, (B, T, H, D), dtype=jnp.float32)
    k = jax.random.normal(kk, (B, T, H, D), dtype=jnp.float32)

    # cos/sin (and the pair-swap matrix) are computed ONCE and reused for q & k.
    cos_t, sin_t, rot = make_rotary_tables(T, H, D)

    fn = jax.jit(apply_rotary)
    yq = jax.block_until_ready(fn(q, cos_t, sin_t, rot))
    yk = jax.block_until_ready(fn(k, cos_t, sin_t, rot))

    assert yq.shape == (B, T, H, D) and yk.shape == (B, T, H, D)
    assert bool(jnp.all(jnp.isfinite(yq))) and bool(jnp.all(jnp.isfinite(yk)))

    ref_q = rotary_reference(q)
    ref_k = rotary_reference(k)
    assert jnp.allclose(yq, ref_q, atol=1e-5, rtol=1e-5), float(jnp.max(jnp.abs(yq - ref_q)))
    assert jnp.allclose(yk, ref_k, atol=1e-5, rtol=1e-5), float(jnp.max(jnp.abs(yk - ref_k)))

    print("KERNEL_OK")
</pallas_src>

<mosaic_0001>
module attributes {stable_mosaic.version = 11 : i64} {
  func.func @rotary_kernel(%arg0: i32, %arg1: i32, %arg2: memref<1x8x32xf32, #tpu.memory_space<vmem>>, %arg3: memref<8x32xf32, #tpu.memory_space<vmem>>, %arg4: memref<8x32xf32, #tpu.memory_space<vmem>>, %arg5: memref<32x32xf32, #tpu.memory_space<vmem>>, %arg6: memref<1x8x32xf32, #tpu.memory_space<vmem>>) attributes {dimension_semantics = [#tpu.dimension_semantics<parallel>, #tpu.dimension_semantics<parallel>], iteration_bounds = array<i64: 2, 1>, scalar_prefetch = 0 : i64, scratch_operands = 0 : i64, tpu.core_type = #tpu.core_type<tc>, window_params = [{transform_indices = @transform_0, window_bounds = array<i64: 1, 8, 32>}, {transform_indices = @transform_1, window_bounds = array<i64: 8, 32>}, {transform_indices = @transform_2, window_bounds = array<i64: 8, 32>}, {pipeline_mode = #tpu.pipeline_mode<synchronous>, transform_indices = @transform_3, window_bounds = array<i64: 32, 32>}, {transform_indices = @transform_4, window_bounds = array<i64: 1, 8, 32>}]} {
    %c0 = arith.constant 0 : index
    %c0_0 = arith.constant 0 : index
    %c0_1 = arith.constant 0 : index
    %0 = vector.load %arg2[%c0, %c0_0, %c0_1] : memref<1x8x32xf32, #tpu.memory_space<vmem>>, vector<1x8x32xf32>
    %1 = vector.shape_cast %0 : vector<1x8x32xf32> to vector<8x32xf32>
    %c0_2 = arith.constant 0 : index
    %c0_3 = arith.constant 0 : index
    %2 = vector.load %arg5[%c0_2, %c0_3] : memref<32x32xf32, #tpu.memory_space<vmem>>, vector<32x32xf32>
    %cst = arith.constant dense<0.000000e+00> : vector<8x32xf32>
    %3 = tpu.matmul %1, %2, %cst {dimension_numbers = #tpu.dot_dimension_numbers<[1], [0], [0], [1], [0, 0, 1, 1], [], []>} : vector<8x32xf32>, vector<32x32xf32>, vector<8x32xf32> -> vector<8x32xf32>
    %c0_4 = arith.constant 0 : index
    %c0_5 = arith.constant 0 : index
    %4 = vector.load %arg3[%c0_4, %c0_5] : memref<8x32xf32, #tpu.memory_space<vmem>>, vector<8x32xf32>
    %5 = arith.mulf %1, %4 : vector<8x32xf32>
    %c0_6 = arith.constant 0 : index
    %c0_7 = arith.constant 0 : index
    %6 = vector.load %arg4[%c0_6, %c0_7] : memref<8x32xf32, #tpu.memory_space<vmem>>, vector<8x32xf32>
    %7 = arith.mulf %3, %6 : vector<8x32xf32>
    %8 = arith.addf %5, %7 : vector<8x32xf32>
    %c0_8 = arith.constant 0 : index
    %c0_9 = arith.constant 0 : index
    %c0_10 = arith.constant 0 : index
    %9 = vector.load %arg6[%c0_8, %c0_9, %c0_10] : memref<1x8x32xf32, #tpu.memory_space<vmem>>, vector<1x8x32xf32>
    %10 = vector.shape_cast %9 : vector<1x8x32xf32> to vector<8x32xf32>
    %11 = vector.shape_cast %8 : vector<8x32xf32> to vector<1x8x32xf32>
    tpu.vector_store %arg6[%c0_8, %c0_9, %c0_10], %11 {strides = array<i32>} : memref<1x8x32xf32, #tpu.memory_space<vmem>>, vector<1x8x32xf32>,
    return
  }
  func.func @transform_0(%arg0: i32, %arg1: i32) -> (i32, i32, i32) {
    %c0_i32 = arith.constant 0 : i32
    %c0_i32_0 = arith.constant 0 : i32
    return %arg0, %arg1, %c0_i32 : i32, i32, i32
  }
  func.func @transform_1(%arg0: i32, %arg1: i32) -> (i32, i32) {
    %c0_i32 = arith.constant 0 : i32
    %c0_i32_0 = arith.constant 0 : i32
    return %arg1, %c0_i32 : i32, i32
  }
  func.func @transform_2(%arg0: i32, %arg1: i32) -> (i32, i32) {
    %c0_i32 = arith.constant 0 : i32
    %c0_i32_0 = arith.constant 0 : i32
    return %arg1, %c0_i32 : i32, i32
  }
  func.func @transform_3(%arg0: i32, %arg1: i32) -> (i32, i32) {
    %c0_i32 = arith.constant 0 : i32
    %c0_i32_0 = arith.constant 0 : i32
    %c0_i32_1 = arith.constant 0 : i32
    return %c0_i32, %c0_i32_0 : i32, i32
  }
  func.func @transform_4(%arg0: i32, %arg1: i32) -> (i32, i32, i32) {
    %c0_i32 = arith.constant 0 : i32
    %c0_i32_0 = arith.constant 0 : i32
    return %arg0, %arg1, %c0_i32 : i32, i32, i32
  }
}

</mosaic_0001>

<llo_original>
// kernel: apply_rotary.1
$region0: #{apply_rotary.1}
  #allocation0 [shape = 'u32[]', space=smem, size = 0x4, offset = 0x4, fixed_abs, tag = 'smem constant byte address 0x4 - core index']
  #allocation1 [shape = 'u32[72,128]{1,0:T(1,128)}', space=vmem, size = 0x9000, scoped, tag = 'internal scratch']
  %s0 = inlined_call_operand.vmem [shape: f32[2,8,32], index: 0, kind: input, shape index: {}]
  %s1 = inlined_call_operand.vmem [shape: f32[8,32], index: 1, kind: input, shape index: {}]
  %s2 = inlined_call_operand.vmem [shape: f32[8,32], index: 2, kind: input, shape index: {}]
  %s3 = inlined_call_operand.vmem [shape: f32[32,32], index: 3, kind: input, shape index: {}]
  %s4 = inlined_call_operand.vmem [shape: f32[2,8,32], index: 4, kind: output, shape index: {}]
  %s5 = sld [smem:[#allocation0]]
  $region49: #{apply_rotary.1} parent=0
    _
  %s7 = ssub.s32 1, %s5
  %s8 = scalar_select 0, %s7, %s5
  loop: start=0, step=1, limit=4
  $region2: #{apply_rotary.1} parent=0 // loop_pre_header
    _
  $region3: #{apply_rotary.1} parent=0 // loop_header
    %s10 = sphi 0, %s14
    %p11 = scmp.ge.s32.totalorder %s10, 4
    %s17 = sphi 0, %s29
    %s18 = sphi 0, %s25
    %s19 = sphi 0, %s17
    %s20 = sphi 0, %s18
    %s21 = sphi 0, %s19
    %s22 = sphi 0, %s20
    %s34 = sphi 0, %s36
    %s37 = sphi 0, %s34
    %s38 = sphi 0, %s37
    %s54 = sphi 0, %s38
    %s60 = sphi 0, %s62
    %s63 = sphi 0, %s60
    %s64 = sphi 0, %s63
    %s80 = sphi 0, %s64
    %s86 = sphi 0, %s88
    %s89 = sphi 0, %s86
    %s90 = sphi 0, %s89
    %s106 = sphi 0, %s90
    %s110 = sphi 0, %s110
    %s112 = sphi 0, %s110
    %s113 = sphi 0, %s112
    %s127 = sphi 0, %s113
    %s135 = sphi 0, %s137
    %s138 = sphi 0, %s135
    %s139 = sphi 0, %s138
    %s155 = sphi 0, %s139
  $region4: #{apply_rotary.1} parent=0 // loop_header_branch
    %13 = sbr.rel (%p11) target = $region8
  $region5: #{apply_rotary.1} parent=0 // loop_body
    %s15 = ssub.s32 %s10, 1
    %s16 = ssub.s32 %s10, 2
    %s23 = sadd.s32 1, %s18
    %p24 = scmp.ge.s32.totalorder %s23, 1
    %s25 = scalar_select %p24, 0, %s23
    %s26 = sadd.s32 1, %s17
    %s27 = scalar_select %p24, %s26, %s17
    %p28 = scmp.ge.s32.totalorder %s27, 2
    %s29 = scalar_select %p28, 0, %s27
    %s30 = ssub.s32 %s17, %s29
    %s31 = ssub.s32 %s18, %s25
    %s32 = sor.u32 %s30, %s31
    %p33 = scmp.eq.s32.totalorder %s32, 0
    %s35 = sadd.s32 %s34, 1
    %s36 = scalar_select %p33, %s34, %s35
    %p39 = pneg %p33
    %p40 = scmp.eq.s32.totalorder %s10, 1
    %p41 = por %p39, %p40
    %p42 = scmp.ne.s32.totalorder %s34, %s37
    %p43 = scmp.eq.s32.totalorder %s10, 0
    %p44 = por %p42, %p43
    %p45 = scmp.ne.s32.totalorder %s34, %s37
    %p46 = scmp.eq.s32.totalorder %s15, 1
    %p47 = por %p45, %p46
    %p48 = scmp.ne.s32.totalorder %s37, %s38
    %p49 = scmp.eq.s32.totalorder %s15, 0
    %p50 = por %p48, %p49
    %p51 = scmp.ne.s32.totalorder %s37, %s38
    %p52 = scmp.eq.s32.totalorder %s16, 1
    %p53 = por %p51, %p52
    %p55 = scmp.ne.s32.totalorder %s38, %s54
    %p56 = scmp.eq.s32.totalorder %s16, 0
    %p57 = por %p55, %p56
    %s58 = ssub.s32 %s18, %s25
    %p59 = scmp.eq.s32.totalorder %s58, 0
    %s61 = sadd.s32 %s60, 1
    %s62 = scalar_select %p59, %s60, %s61
    %p65 = pneg %p59
    %p66 = scmp.eq.s32.totalorder %s10, 1
    %p67 = por %p65, %p66
    %p68 = scmp.ne.s32.totalorder %s60, %s63
    %p69 = scmp.eq.s32.totalorder %s10, 0
    %p70 = por %p68, %p69
    %p71 = scmp.ne.s32.totalorder %s60, %s63
    %p72 = scmp.eq.s32.totalorder %s15, 1
    %p73 = por %p71, %p72
    %p74 = scmp.ne.s32.totalorder %s63, %s64
    %p75 = scmp.eq.s32.totalorder %s15, 0
    %p76 = por %p74, %p75
    %p77 = scmp.ne.s32.totalorder %s63, %s64
    %p78 = scmp.eq.s32.totalorder %s16, 1
    %p79 = por %p77, %p78
    %p81 = scmp.ne.s32.totalorder %s64, %s80
    %p82 = scmp.eq.s32.totalorder %s16, 0
    %p83 = por %p81, %p82
    %s84 = ssub.s32 %s18, %s25
    %p85 = scmp.eq.s32.totalorder %s84, 0
    %s87 = sadd.s32 %s86, 1
    %s88 = scalar_select %p85, %s86, %s87
    %p91 = pneg %p85
    %p92 = scmp.eq.s32.totalorder %s10, 1
    %p93 = por %p91, %p92
    %p94 = scmp.ne.s32.totalorder %s86, %s89
    %p95 = scmp.eq.s32.totalorder %s10, 0
    %p96 = por %p94, %p95
    %p97 = scmp.ne.s32.totalorder %s86, %s89
    %p98 = scmp.eq.s32.totalorder %s15, 1
    %p99 = por %p97, %p98
    %p100 = scmp.ne.s32.totalorder %s89, %s90
    %p101 = scmp.eq.s32.totalorder %s15, 0
    %p102 = por %p100, %p101
    %p103 = scmp.ne.s32.totalorder %s89, %s90
    %p104 = scmp.eq.s32.totalorder %s16, 1
    %p105 = por %p103, %p104
    %p107 = scmp.ne.s32.totalorder %s90, %s106
    %p108 = scmp.eq.s32.totalorder %s16, 0
    %p109 = por %p107, %p108
    %s111 = sadd.s32 %s110, 1
    %p114 = scmp.eq.s32.totalorder %s10, 1
    %p115 = scmp.ne.s32.totalorder %s110, %s112
    %p116 = scmp.eq.s32.totalorder %s10, 0
    %p117 = por %p115, %p116
    %p118 = scmp.ne.s32.totalorder %s110, %s112
    %p119 = scmp.eq.s32.totalorder %s15, 1
    %p120 = por %p118, %p119
    %p121 = scmp.ne.s32.totalorder %s112, %s113
    %p122 = scmp.eq.s32.totalorder %s15, 0
    %p123 = por %p121, %p122
    %p124 = scmp.ne.s32.totalorder %s112, %s113
    %p125 = scmp.eq.s32.totalorder %s16, 1
    %p126 = por %p124, %p125
    %p128 = scmp.ne.s32.totalorder %s113, %s127
    %p129 = scmp.eq.s32.totalorder %s16, 0
    %p130 = por %p128, %p129
    %s131 = ssub.s32 %s17, %s29
    %s132 = ssub.s32 %s18, %s25
    %s133 = sor.u32 %s131, %s132
    %p134 = scmp.eq.s32.totalorder %s133, 0
    %s136 = sadd.s32 %s135, 1
    %s137 = scalar_select %p134, %s135, %s136
    %p140 = pneg %p134
    %p141 = scmp.eq.s32.totalorder %s10, 1
    %p142 = por %p140, %p141
    %p143 = scmp.ne.s32.totalorder %s135, %s138
    %p144 = scmp.eq.s32.totalorder %s10, 0
    %p145 = por %p143, %p144
    %p146 = scmp.ne.s32.totalorder %s135, %s138
    %p147 = scmp.eq.s32.totalorder %s15, 1
    %p148 = por %p146, %p147
    %p149 = scmp.ne.s32.totalorder %s138, %s139
    %p150 = scmp.eq.s32.totalorder %s15, 0
    %p151 = por %p149, %p150
    %p152 = scmp.ne.s32.totalorder %s138, %s139
    %p153 = scmp.eq.s32.totalorder %s16, 1
    %p154 = por %p152, %p153
    %p156 = scmp.ne.s32.totalorder %s139, %s155
    %p157 = scmp.eq.s32.totalorder %s16, 0
    %p158 = por %p156, %p157
    %p159 = scmp.le.s32.totalorder 1, %s10
    %p160 = scmp.lt.s32.totalorder %s10, 3
    %p161 = pnand %p159, %p160
    %p162 = pneg %p161
    // Predicated region
    $region9: #{apply_rotary.1} parent=5 // pred_check
      _
    $region10: #{apply_rotary.1} parent=5 // pred_check_branch
      %164 = sbr.rel (%p161) target = $region12
    $region11: #{apply_rotary.1} parent=5 // pred_region
      %s165 = ssub.s32 %s10, 1
      // Predicated region
      $region13: #{apply_rotary.1} parent=11 // pred_check
        %p166 = pneg %p76
      $region14: #{apply_rotary.1} parent=11 // pred_check_branch
        %168 = sbr.rel (%p166) target = $region16
      $region15: #{apply_rotary.1} parent=11 // pred_region
        %p169 = scmp.lt.s32.totalorder %s20, 0
        %s170 = scalar_select %p169, %s20, 0
        %s171 = smul.addr %s170, 8
        %s172 = scalar_lea.vmem %s1, %s171
      $region16: #{apply_rotary.1} parent=11 // pred_fallthru
        _
      // Predicated region
      $region17: #{apply_rotary.1} parent=11 // pred_check
        %p173 = pneg %p102
      $region18: #{apply_rotary.1} parent=11 // pred_check_branch
        %175 = sbr.rel (%p173) target = $region20
      $region19: #{apply_rotary.1} parent=11 // pred_region
        %p176 = scmp.lt.s32.totalorder %s20, 0
        %s177 = scalar_select %p176, %s20, 0
        %s178 = smul.addr %s177, 8
        %s179 = scalar_lea.vmem %s2, %s178
      $region20: #{apply_rotary.1} parent=11 // pred_fallthru
        _
      // Predicated region
      $region21: #{apply_rotary.1} parent=11 // pred_check
        %p180 = pneg %p123
      $region22: #{apply_rotary.1} parent=11 // pred_check_branch
        %182 = sbr.rel (%p180) target = $region24
      $region23: #{apply_rotary.1} parent=11 // pred_region
        _
      $region24: #{apply_rotary.1} parent=11 // pred_fallthru
        _
    $region12: #{apply_rotary.1} parent=5 // pred_fallthru
      _
    %p183 = scmp.lt.s32.totalorder %s10, 2
    // Predicated region
    $region25: #{apply_rotary.1} parent=5 // pred_check
      %p184 = pneg %p183
    $region26: #{apply_rotary.1} parent=5 // pred_check_branch
      %186 = sbr.rel (%p184) target = $region28
    $region27: #{apply_rotary.1} parent=5 // pred_region
      // Predicated region
      $region29: #{apply_rotary.1} parent=27 // pred_check
        %p187 = pneg %p44
      $region30: #{apply_rotary.1} parent=27 // pred_check_branch
        %189 = sbr.rel (%p187) target = $region32
      $region31: #{apply_rotary.1} parent=27 // pred_region
        %p190 = scmp.lt.s32.totalorder %s17, 1
        %s191 = scalar_select %p190, %s17, 1
        %p192 = scmp.lt.s32.totalorder %s18, 0
        %s193 = scalar_select %p192, %s18, 0
        %s194 = sadd.s32 %s193, %s191
        %s195 = smul.addr %s194, 8
        %s196 = scalar_lea.vmem %s0, %s195
      $region32: #{apply_rotary.1} parent=27 // pred_fallthru
        _
    $region28: #{apply_rotary.1} parent=5 // pred_fallthru
      _
    %p197 = scmp.le.s32.totalorder 1, %s10
    %p198 = scmp.lt.s32.totalorder %s10, 3
    %p199 = pnand %p197, %p198
    %p200 = pneg %p199
    // Predicated region
    $region33: #{apply_rotary.1} parent=5 // pred_check
      _
    $region34: #{apply_rotary.1} parent=5 // pred_check_branch
      %202 = sbr.rel (%p199) target = $region36
    $region35: #{apply_rotary.1} parent=5 // pred_region
      %s203 = ssub.s32 %s10, 1
      %p204 = scmp.lt.s32.totalorder %s19, 1
      %s205 = scalar_select %p204, %s19, 1
      %p206 = scmp.lt.s32.totalorder %s20, 0
      %s207 = scalar_select %p206, %s20, 0
      %s208 = sadd.s32 %s207, %s205
      %s209 = smul.addr %s208, 8
      %s210 = scalar_lea.vmem %s0, %s209
      %p211 = pneg %p50
      %p212 = pneg %p47
      %p213 = scmp.lt.s32.totalorder %s20, 0
      %s214 = scalar_select %p213, %s20, 0
      %s215 = smul.addr %s214, 8
      %s216 = scalar_lea.vmem %s1, %s215
      %p217 = pneg %p76
      %p218 = pneg %p73
      %p219 = scmp.lt.s32.totalorder %s20, 0
      %s220 = scalar_select %p219, %s20, 0
      %s221 = smul.addr %s220, 8
      %s222 = scalar_lea.vmem %s2, %s221
      %p223 = pneg %p102
      %p224 = pneg %p99
      %p225 = pneg %p123
      %p226 = pneg %p120
      %p227 = pneg %p151
      %p228 = pneg %p148
      %p229 = scmp.lt.s32.totalorder %s19, 1
      %s230 = scalar_select %p229, %s19, 1
      %p231 = scmp.lt.s32.totalorder %s20, 0
      %s232 = scalar_select %p231, %s20, 0
      %s233 = sadd.s32 %s232, %s230
      %s234 = smul.addr %s233, 8
      %s235 = scalar_lea.vmem %s4, %s234
      %p236 = scmp.lt.s32.totalorder %s19, 1
      %s237 = scalar_select %p236, %s19, 1
      %p238 = scmp.lt.s32.totalorder %s20, 0
      %s239 = scalar_select %p238, %s20, 0
      %s240 = sadd.s32 %s239, %s237
      %s241 = smul.addr %s240, 8
      %s242 = scalar_lea.vmem %s0, %s241
      %p243 = scmp.lt.s32.totalorder %s20, 0
      %s244 = scalar_select %p243, %s20, 0
      %s245 = smul.addr %s244, 8
      %s246 = scalar_lea.vmem %s1, %s245
      %p247 = scmp.lt.s32.totalorder %s20, 0
      %s248 = scalar_select %p247, %s20, 0
      %s249 = smul.addr %s248, 8
      %s250 = scalar_lea.vmem %s2, %s249
      %p251 = scmp.lt.s32.totalorder %s19, 1
      %s252 = scalar_select %p251, %s19, 1
      %p253 = scmp.lt.s32.totalorder %s20, 0
      %s254 = scalar_select %p253, %s20, 0
      %s255 = sadd.s32 %s254, %s252
      %s256 = smul.addr %s255, 8
      %s257 = scalar_lea.vmem %s4, %s256
      %v258 = vld [vmem:[%s242] sm:$0xff]
      %v259 = vld [vmem:[%s3] sm:$0xff]
      %v260 = vld [vmem:[%s3 + $0x8] sm:$0xff]
      %v261 = vld [vmem:[%s3 + $0x10] sm:$0xff]
      %v262 = vld [vmem:[%s3 + $0x18] sm:$0xff]
      %vm263 = vcmask 261120
      %v265 = vsel %vm263, %v258, 0
      %267 = vmatpush.msra.mxu0 0.0
      %268 = vmatpush.msra.mxu0 0.0
      %269 = vmatpush.msra.mxu0 0.0
      %270 = vmatpush.msra.mxu0 0.0
      %271 = vmatpush.msra.mxu0 0.0
      %272 = vmatpush.msra.mxu0 0.0
      %273 = vmatpush.msra.mxu0 0.0
      %274 = vmatpush.msra.mxu0 0.0
      %275 = vmatpush.msra.mxu0 0.0
      %276 = vmatpush.msra.mxu0 0.0
      %277 = vmatpush.msra.mxu0 0.0
      %278 = vmatpush.msra.mxu0 0.0
      %279 = vmatpush.msra.mxu0 %v262
      %280 = vmatpush.msra.mxu0 %v261
      %281 = vmatpush.msra.mxu0 %v260
      %282 = vmatpush.msra.mxu0 %v259
      %283 = vmatmul.f32.gmra.mxu0 %v265
      %v284 = vpop.f32.mrf.mxu0
      %v285 = vadd.f32 0.0, %v284
      %286 = vdwg.mxu0
      %v287 = vld [vmem:[%s246] sm:$0xff]
      %v288 = vmul.f32 %v258, %v287
      %v289 = vld [vmem:[%s250] sm:$0xff]
      %v290 = vmul.f32 %v285, %v289
      %v291 = vadd.f32 %v288, %v290
      %292 = vst.msk [vmem:[%s257] sm:$0xff] %vm263, %v291
      %p293 = scmp.lt.s32.totalorder %s19, 1
      %s294 = scalar_select %p293, %s19, 1
      %p295 = scmp.lt.s32.totalorder %s20, 0
      %s296 = scalar_select %p295, %s20, 0
      %s297 = sadd.s32 %s296, %s294
      %s298 = smul.addr %s297, 8
      %s299 = scalar_lea.vmem %s4, %s298
      // Predicated region
      $region37: #{apply_rotary.1} parent=35 // pred_check
        %p300 = pneg %p148
      $region38: #{apply_rotary.1} parent=35 // pred_check_branch
        %302 = sbr.rel (%p300) target = $region40
      $region39: #{apply_rotary.1} parent=35 // pred_region
        _
      $region40: #{apply_rotary.1} parent=35 // pred_fallthru
        _
    $region36: #{apply_rotary.1} parent=5 // pred_fallthru
      _
    %p303 = scmp.le.s32.totalorder 2, %s10
    // Predicated region
    $region41: #{apply_rotary.1} parent=5 // pred_check
      %p304 = pneg %p303
    $region42: #{apply_rotary.1} parent=5 // pred_check_branch
      %306 = sbr.rel (%p304) target = $region44
    $region43: #{apply_rotary.1} parent=5 // pred_region
      %s307 = ssub.s32 %s10, 2
      // Predicated region
      $region45: #{apply_rotary.1} parent=43 // pred_check
        %p308 = pneg %p154
      $region46: #{apply_rotary.1} parent=43 // pred_check_branch
        %310 = sbr.rel (%p308) target = $region48
      $region47: #{apply_rotary.1} parent=43 // pred_region
        %p311 = scmp.lt.s32.totalorder %s21, 1
        %s312 = scalar_select %p311, %s21, 1
        %p313 = scmp.lt.s32.totalorder %s22, 0
        %s314 = scalar_select %p313, %s22, 0
        %s315 = sadd.s32 %s314, %s312
        %s316 = smul.addr %s315, 8
        %s317 = scalar_lea.vmem %s4, %s316
      $region48: #{apply_rotary.1} parent=43 // pred_fallthru
        _
    $region44: #{apply_rotary.1} parent=5 // pred_fallthru
      _
  $region6: #{apply_rotary.1} parent=0 // loop_footer
    %s14 = sadd.s32 1, %s10
  $region7: #{apply_rotary.1} parent=0 // loop_footer_branch
    %9 = sbr.rel target = $region3
  $region8: #{apply_rotary.1} parent=0 // loop_exit
    _

</llo_original>
